<compile_context>
chip_gen: v5e
topology: v5e:2x2
jax: 0.10.0
libtpu: 0.0.40
codegen_flags: <defaults>
</compile_context>

<pallas_src>
import jax
import jax.numpy as jnp
from jax.experimental import pallas as pl
from jax.experimental.pallas import tpu as pltpu

SF = 1.0     # sf
ELL = 0.75   # lengthscale


# ---------------------------------------------------------------------------
# Pallas kernel (hot path): out^T tile = (Kzz^{-1} U)^T @ K(Z, X_tile)
# All grid-invariant quantities (scaled Z, its squared norms, W^T) are
# precomputed in the wrapper and kept whole in VMEM.
# ---------------------------------------------------------------------------
def _kreg_forward_body(xt_ref, zs_ref, zsq_ref, wt_ref, ot_ref):
    # xt_ref : (D, tn)  X^T pre-scaled by 1/ell  (lane-dense query tile)
    # zs_ref : (M, D)   Z   pre-scaled by 1/ell  (grid-invariant)
    # zsq_ref: (M, 1)   ||Z/ell||^2 per row      (grid-invariant)
    # wt_ref : (D, M)   (Kzz^{-1} U)^T           (grid-invariant, folded)
    # ot_ref : (D, tn)  transposed output tile   (lane-dense store)
    M, D = zs_ref.shape

    xt = xt_ref[...]                                     # (D, tn)
    xsq = jnp.sum(xt * xt, axis=0, keepdims=True)        # (1, tn)

    # Cross term (Z/ell) @ (X/ell)^T with contraction dim D (tiny): unrolled
    # VPU broadcast-FMAs instead of a K=D MXU matmul.
    zs = zs_ref[...]                                     # (M, D)
    cross = zs[:, 0:1] * xt[0:1, :]                      # (M, tn)
    for d in range(1, D):
        cross = cross + zs[:, d:d + 1] * xt[d:d + 1, :]

    dist = zsq_ref[...] + xsq - 2.0 * cross              # (M, tn)
    kzx = (SF * SF) * jnp.exp(-0.5 * dist)               # (M, tn) = K(Z, X_tile)

    # out^T = W^T @ K(Z, X_tile).  M is tiny here (8): unrolled VPU FMAs;
    # fall back to the MXU if M ever grows large enough to be worth it.
    wt = wt_ref[...]                                     # (D, M)
    if M <= 32:
        acc = wt[:, 0:1] * kzx[0:1, :]                   # (D, tn)
        for m in range(1, M):
            acc = acc + wt[:, m:m + 1] * kzx[m:m + 1, :]
        ot_ref[...] = acc
    else:
        ot_ref[...] = jnp.dot(wt, kzx, preferred_element_type=jnp.float32)


def kreg_forward(X, Z, W, *, tn_max=512):
    """out = K(X, Z) @ W  with W = Kzz^{-1} @ U precomputed by the caller."""
    N, D = X.shape
    M, D2 = Z.shape
    assert D == D2 and W.shape == (M, D)

    X = X.astype(jnp.float32)
    Z = Z.astype(jnp.float32)
    W = W.astype(jnp.float32)

    inv_ell = 1.0 / ELL
    # Grid-invariant Z work hoisted out of the kernel.
    Zs = Z * inv_ell                                     # (M, D)
    zsq = jnp.sum(Zs * Zs, axis=1, keepdims=True)        # (M, 1)
    Wt = W.T                                             # (D, M)

    # Lane tile: multiple of 128, up to tn_max, while keeping >= 2 grid steps
    # when N is large enough (v7x shares the grid across 2 TensorCores).
    tn = 128
    while tn * 2 <= tn_max and pl.cdiv(N, tn * 2) >= 2:
        tn *= 2
    n_pad = tn * pl.cdiv(N, tn)

    # Pre-scale and transpose X so the large N axis sits on lanes.
    Xt = (X * inv_ell).T                                 # (D, N)
    if n_pad != N:
        Xt = jnp.pad(Xt, ((0, 0), (0, n_pad - N)))

    # VMEM per step: (D, tn) in + (D, tn) out + tiny constants -> a few KiB,
    # far under any generation's scoped-VMEM default (no vmem_limit needed).
    out_t = pl.pallas_call(
        _kreg_forward_body,
        out_shape=jax.ShapeDtypeStruct((D, n_pad), jnp.float32),
        grid=(n_pad // tn,),
        in_specs=[pl.BlockSpec((D, tn), lambda i: (0, i)),
                  pl.BlockSpec((M, D), lambda i: (0, 0)),
                  pl.BlockSpec((M, 1), lambda i: (0, 0)),
                  pl.BlockSpec((D, M), lambda i: (0, 0))],
        out_specs=pl.BlockSpec((D, tn), lambda i: (0, i)),
        compiler_params=pltpu.CompilerParams(
            dimension_semantics=("parallel",)),
    )(Xt, Zs, zsq, Wt)

    return out_t[:, :N].T                                # (N, D)


# ---------------------------------------------------------------------------
# JAX-side module mirroring the PyTorch KernelRegression
# ---------------------------------------------------------------------------
class KernelRegression:
    def __init__(self, key, M=8, D=2):
        kz, ku = jax.random.split(key)
        # Deterministic synthetic init standing in for Z (inducing points) and
        # U0 = Kxz @ Kzzinv @ F_ of the original script.
        self.Z = jax.random.normal(kz, (M, D), dtype=jnp.float32)
        self.U = jax.random.normal(ku, (M, D), dtype=jnp.float32)
        self.logsn = jnp.zeros((2,), dtype=jnp.float32)  # unused in forward

    def forward(self, t, X):
        # Tiny (M, M) prologue in plain JAX: Kzz and W = Kzz^{-1} @ U.
        # Using a linear solve instead of the PyTorch explicit .inverse() —
        # mathematically identical, better conditioned in f32.
        # TODO(synk): the (M,M) linear solve has no Pallas TPU equivalent;
        # it stays in plain JAX (it is grid-invariant and 8x8 anyway).
        Zs = self.Z / ELL
        zsq = jnp.sum(Zs * Zs, axis=1, keepdims=True)
        Kzz = (SF ** 2) * jnp.exp(-0.5 * (-2.0 * Zs @ Zs.T + zsq + zsq.T))
        W = jnp.linalg.solve(Kzz, self.U)                # == Kzzinv @ U
        return kreg_forward(X, self.Z, W)                # Pallas hot path


# Pure-JAX reference for sanity checking (same math, no Pallas)
def _reference_forward(X, Z, U):
    def Kref(a, b):
        a = a / ELL
        b = b / ELL
        d = (-2.0 * a @ b.T
             + jnp.sum(a * a, 1)[:, None] + jnp.sum(b * b, 1)[None, :])
        return (SF ** 2) * jnp.exp(-0.5 * d)
    W = jnp.linalg.solve(Kref(Z, Z), U)
    return Kref(X, Z) @ W


if __name__ == "__main__":
    key = jax.random.PRNGKey(0)
    k_mod, k_x = jax.random.split(key)

    N, M, D = 16, 8, 2
    model = KernelRegression(k_mod, M=M, D=D)
    X = jax.random.normal(k_x, (N, D), dtype=jnp.float32)
    t = jnp.float32(0.0)  # unused by forward (matches PyTorch signature)

    out = model.forward(t, X)
    out = jax.block_until_ready(out)

    ref = _reference_forward(X, model.Z, model.U)
    assert out.shape == (N, D)
    assert jnp.allclose(out, ref, atol=1e-3, rtol=1e-3), "mismatch vs reference"

    print("KERNEL_OK")
</pallas_src>

<mosaic_0001>
module attributes {stable_mosaic.version = 11 : i64} {
  func.func @_kreg_forward_body(%arg0: i32, %arg1: memref<2x128xf32, #tpu.memory_space<vmem>>, %arg2: memref<8x2xf32, #tpu.memory_space<vmem>>, %arg3: memref<8x1xf32, #tpu.memory_space<vmem>>, %arg4: memref<2x8xf32, #tpu.memory_space<vmem>>, %arg5: memref<2x128xf32, #tpu.memory_space<vmem>>) attributes {dimension_semantics = [#tpu.dimension_semantics<parallel>], iteration_bounds = array<i64: 1>, scalar_prefetch = 0 : i64, scratch_operands = 0 : i64, tpu.core_type = #tpu.core_type<tc>, window_params = [{transform_indices = @transform_0, window_bounds = array<i64: 2, 128>}, {pipeline_mode = #tpu.pipeline_mode<synchronous>, transform_indices = @transform_1, window_bounds = array<i64: 8, 2>}, {pipeline_mode = #tpu.pipeline_mode<synchronous>, transform_indices = @transform_2, window_bounds = array<i64: 8, 1>}, {pipeline_mode = #tpu.pipeline_mode<synchronous>, transform_indices = @transform_3, window_bounds = array<i64: 2, 8>}, {transform_indices = @transform_4, window_bounds = array<i64: 2, 128>}]} {
    %c0 = arith.constant 0 : index
    %c0_0 = arith.constant 0 : index
    %0 = vector.load %arg1[%c0, %c0_0] : memref<2x128xf32, #tpu.memory_space<vmem>>, vector<2x128xf32>
    %1 = arith.mulf %0, %0 : vector<2x128xf32>
    %cst = arith.constant dense<0.000000e+00> : vector<128xf32>
    %2 = vector.multi_reduction <add>, %1, %cst [0] : vector<2x128xf32> to vector<128xf32>
    %3 = vector.shape_cast %2 : vector<128xf32> to vector<1x128xf32>
    %c0_1 = arith.constant 0 : index
    %c0_2 = arith.constant 0 : index
    %4 = vector.load %arg2[%c0_1, %c0_2] : memref<8x2xf32, #tpu.memory_space<vmem>>, vector<8x2xf32>
    %5 = vector.extract_strided_slice %4 {offsets = [0, 0], sizes = [8, 1], strides = [1, 1]} : vector<8x2xf32> to vector<8x1xf32>
    %6 = vector.extract_strided_slice %0 {offsets = [0, 0], sizes = [1, 128], strides = [1, 1]} : vector<2x128xf32> to vector<1x128xf32>
    %7 = vector.broadcast %5 : vector<8x1xf32> to vector<8x128xf32>
    %8 = vector.broadcast %6 : vector<1x128xf32> to vector<8x128xf32>
    %9 = arith.mulf %7, %8 : vector<8x128xf32>
    %10 = vector.extract_strided_slice %4 {offsets = [0, 1], sizes = [8, 1], strides = [1, 1]} : vector<8x2xf32> to vector<8x1xf32>
    %11 = vector.extract_strided_slice %0 {offsets = [1, 0], sizes = [1, 128], strides = [1, 1]} : vector<2x128xf32> to vector<1x128xf32>
    %12 = vector.broadcast %10 : vector<8x1xf32> to vector<8x128xf32>
    %13 = vector.broadcast %11 : vector<1x128xf32> to vector<8x128xf32>
    %14 = arith.mulf %12, %13 : vector<8x128xf32>
    %15 = arith.addf %9, %14 : vector<8x128xf32>
    %c0_3 = arith.constant 0 : index
    %c0_4 = arith.constant 0 : index
    %16 = vector.load %arg3[%c0_3, %c0_4] : memref<8x1xf32, #tpu.memory_space<vmem>>, vector<8x1xf32>
    %17 = vector.broadcast %16 : vector<8x1xf32> to vector<8x128xf32>
    %18 = vector.broadcast %3 : vector<1x128xf32> to vector<8x128xf32>
    %19 = arith.addf %17, %18 : vector<8x128xf32>
    %cst_5 = arith.constant 2.000000e+00 : f32
    %20 = vector.broadcast %cst_5 : f32 to vector<8x128xf32>
    %21 = arith.mulf %20, %15 : vector<8x128xf32>
    %22 = arith.subf %19, %21 : vector<8x128xf32>
    %cst_6 = arith.constant -5.000000e-01 : f32
    %23 = vector.broadcast %cst_6 : f32 to vector<8x128xf32>
    %24 = arith.mulf %23, %22 : vector<8x128xf32>
    %25 = math.exp %24 : vector<8x128xf32>
    %cst_7 = arith.constant 1.000000e+00 : f32
    %26 = vector.broadcast %cst_7 : f32 to vector<8x128xf32>
    %27 = arith.mulf %26, %25 : vector<8x128xf32>
    %c0_8 = arith.constant 0 : index
    %c0_9 = arith.constant 0 : index
    %28 = vector.load %arg4[%c0_8, %c0_9] : memref<2x8xf32, #tpu.memory_space<vmem>>, vector<2x8xf32>
    %29 = vector.extract_strided_slice %28 {offsets = [0, 0], sizes = [2, 1], strides = [1, 1]} : vector<2x8xf32> to vector<2x1xf32>
    %30 = vector.extract_strided_slice %27 {offsets = [0, 0], sizes = [1, 128], strides = [1, 1]} : vector<8x128xf32> to vector<1x128xf32>
    %31 = vector.broadcast %29 : vector<2x1xf32> to vector<2x128xf32>
    %32 = vector.broadcast %30 : vector<1x128xf32> to vector<2x128xf32>
    %33 = arith.mulf %31, %32 : vector<2x128xf32>
    %34 = vector.extract_strided_slice %28 {offsets = [0, 1], sizes = [2, 1], strides = [1, 1]} : vector<2x8xf32> to vector<2x1xf32>
    %35 = vector.extract_strided_slice %27 {offsets = [1, 0], sizes = [1, 128], strides = [1, 1]} : vector<8x128xf32> to vector<1x128xf32>
    %36 = vector.broadcast %34 : vector<2x1xf32> to vector<2x128xf32>
    %37 = vector.broadcast %35 : vector<1x128xf32> to vector<2x128xf32>
    %38 = arith.mulf %36, %37 : vector<2x128xf32>
    %39 = arith.addf %33, %38 : vector<2x128xf32>
    %40 = vector.extract_strided_slice %28 {offsets = [0, 2], sizes = [2, 1], strides = [1, 1]} : vector<2x8xf32> to vector<2x1xf32>
    %41 = vector.extract_strided_slice %27 {offsets = [2, 0], sizes = [1, 128], strides = [1, 1]} : vector<8x128xf32> to vector<1x128xf32>
    %42 = vector.broadcast %40 : vector<2x1xf32> to vector<2x128xf32>
    %43 = vector.broadcast %41 : vector<1x128xf32> to vector<2x128xf32>
    %44 = arith.mulf %42, %43 : vector<2x128xf32>
    %45 = arith.addf %39, %44 : vector<2x128xf32>
    %46 = vector.extract_strided_slice %28 {offsets = [0, 3], sizes = [2, 1], strides = [1, 1]} : vector<2x8xf32> to vector<2x1xf32>
    %47 = vector.extract_strided_slice %27 {offsets = [3, 0], sizes = [1, 128], strides = [1, 1]} : vector<8x128xf32> to vector<1x128xf32>
    %48 = vector.broadcast %46 : vector<2x1xf32> to vector<2x128xf32>
    %49 = vector.broadcast %47 : vector<1x128xf32> to vector<2x128xf32>
    %50 = arith.mulf %48, %49 : vector<2x128xf32>
    %51 = arith.addf %45, %50 : vector<2x128xf32>
    %52 = vector.extract_strided_slice %28 {offsets = [0, 4], sizes = [2, 1], strides = [1, 1]} : vector<2x8xf32> to vector<2x1xf32>
    %53 = vector.extract_strided_slice %27 {offsets = [4, 0], sizes = [1, 128], strides = [1, 1]} : vector<8x128xf32> to vector<1x128xf32>
    %54 = vector.broadcast %52 : vector<2x1xf32> to vector<2x128xf32>
    %55 = vector.broadcast %53 : vector<1x128xf32> to vector<2x128xf32>
    %56 = arith.mulf %54, %55 : vector<2x128xf32>
    %57 = arith.addf %51, %56 : vector<2x128xf32>
    %58 = vector.extract_strided_slice %28 {offsets = [0, 5], sizes = [2, 1], strides = [1, 1]} : vector<2x8xf32> to vector<2x1xf32>
    %59 = vector.extract_strided_slice %27 {offsets = [5, 0], sizes = [1, 128], strides = [1, 1]} : vector<8x128xf32> to vector<1x128xf32>
    %60 = vector.broadcast %58 : vector<2x1xf32> to vector<2x128xf32>
    %61 = vector.broadcast %59 : vector<1x128xf32> to vector<2x128xf32>
    %62 = arith.mulf %60, %61 : vector<2x128xf32>
    %63 = arith.addf %57, %62 : vector<2x128xf32>
    %64 = vector.extract_strided_slice %28 {offsets = [0, 6], sizes = [2, 1], strides = [1, 1]} : vector<2x8xf32> to vector<2x1xf32>
    %65 = vector.extract_strided_slice %27 {offsets = [6, 0], sizes = [1, 128], strides = [1, 1]} : vector<8x128xf32> to vector<1x128xf32>
    %66 = vector.broadcast %64 : vector<2x1xf32> to vector<2x128xf32>
    %67 = vector.broadcast %65 : vector<1x128xf32> to vector<2x128xf32>
    %68 = arith.mulf %66, %67 : vector<2x128xf32>
    %69 = arith.addf %63, %68 : vector<2x128xf32>
    %70 = vector.extract_strided_slice %28 {offsets = [0, 7], sizes = [2, 1], strides = [1, 1]} : vector<2x8xf32> to vector<2x1xf32>
    %71 = vector.extract_strided_slice %27 {offsets = [7, 0], sizes = [1, 128], strides = [1, 1]} : vector<8x128xf32> to vector<1x128xf32>
    %72 = vector.broadcast %70 : vector<2x1xf32> to vector<2x128xf32>
    %73 = vector.broadcast %71 : vector<1x128xf32> to vector<2x128xf32>
    %74 = arith.mulf %72, %73 : vector<2x128xf32>
    %75 = arith.addf %69, %74 : vector<2x128xf32>
    %c0_10 = arith.constant 0 : index
    %c0_11 = arith.constant 0 : index
    %76 = vector.load %arg5[%c0_10, %c0_11] : memref<2x128xf32, #tpu.memory_space<vmem>>, vector<2x128xf32>
    tpu.vector_store %arg5[%c0_10, %c0_11], %75 {strides = array<i32>} : memref<2x128xf32, #tpu.memory_space<vmem>>, vector<2x128xf32>,
    return
  }
  func.func @transform_0(%arg0: i32) -> (i32, i32) {
    %c0_i32 = arith.constant 0 : i32
    %c0_i32_0 = arith.constant 0 : i32
    return %c0_i32, %arg0 : i32, i32
  }
  func.func @transform_1(%arg0: i32) -> (i32, i32) {
    %c0_i32 = arith.constant 0 : i32
    %c0_i32_0 = arith.constant 0 : i32
    %c0_i32_1 = arith.constant 0 : i32
    return %c0_i32, %c0_i32_0 : i32, i32
  }
  func.func @transform_2(%arg0: i32) -> (i32, i32) {
    %c0_i32 = arith.constant 0 : i32
    %c0_i32_0 = arith.constant 0 : i32
    %c0_i32_1 = arith.constant 0 : i32
    return %c0_i32, %c0_i32_0 : i32, i32
  }
  func.func @transform_3(%arg0: i32) -> (i32, i32) {
    %c0_i32 = arith.constant 0 : i32
    %c0_i32_0 = arith.constant 0 : i32
    %c0_i32_1 = arith.constant 0 : i32
    return %c0_i32, %c0_i32_0 : i32, i32
  }
  func.func @transform_4(%arg0: i32) -> (i32, i32) {
    %c0_i32 = arith.constant 0 : i32
    %c0_i32_0 = arith.constant 0 : i32
    return %c0_i32, %arg0 : i32, i32
  }
}

</mosaic_0001>

<llo_original>
// kernel: tpu_custom_call.1
$region0: #{tpu_custom_call.1}
  #allocation0 [shape = 'u32[]', space=smem, size = 0x4, offset = 0x4, fixed_abs, tag = 'smem constant byte address 0x4 - core index']
  #allocation1 [shape = 'u32[72,128]{1,0:T(1,128)}', space=vmem, size = 0x9000, scoped, tag = 'internal scratch']
  %s0 = inlined_call_operand.vmem [shape: f32[2,128], index: 0, kind: input, shape index: {}]
  %s1 = inlined_call_operand.vmem [shape: f32[8,2], index: 1, kind: input, shape index: {}]
  %s2 = inlined_call_operand.vmem [shape: f32[8,1], index: 2, kind: input, shape index: {}]
  %s3 = inlined_call_operand.vmem [shape: f32[2,8], index: 3, kind: input, shape index: {}]
  %s4 = inlined_call_operand.hbm [shape: f32[2,128], index: 4, kind: output, shape index: {}]
  %s5 = sld [smem:[#allocation0]]
  $region26: #{tpu_custom_call.1} parent=0
    _
  %s7 = ssub.s32 1, %s5
  %s8 = scalar_select 0, %s7, %s5
  $region1: #{tpu_custom_call.1} parent=0
    #allocation2 [shape = 'u8[1024]{0}', space=vmem, size = 0x400, scoped, tag = 'output window, operand 0, single buffered']
    #allocation3 [shape = 's32[1]{0}', space=sflag, size = 0x4, scoped, tag = 'scoped memory for tpu_custom_call.1']
    %9 = vsyncpa [#allocation3], 0
    // Predicated region
    $region2: #{tpu_custom_call.1} parent=1 // pred_check
      _
    $region3: #{tpu_custom_call.1} parent=1 // pred_check_branch
      %11 = sbr.rel (0) target = $region5
    $region4: #{tpu_custom_call.1} parent=1 // pred_region
      _
    $region5: #{tpu_custom_call.1} parent=1 // pred_fallthru
      _
    // Predicated region
    $region6: #{tpu_custom_call.1} parent=1 // pred_check
      _
    $region7: #{tpu_custom_call.1} parent=1 // pred_check_branch
      %13 = sbr.rel (0) target = $region9
    $region8: #{tpu_custom_call.1} parent=1 // pred_region
      _
    $region9: #{tpu_custom_call.1} parent=1 // pred_fallthru
      _
    // Predicated region
    $region10: #{tpu_custom_call.1} parent=1 // pred_check
      _
    $region11: #{tpu_custom_call.1} parent=1 // pred_check_branch
      %15 = sbr.rel (0) target = $region13
    $region12: #{tpu_custom_call.1} parent=1 // pred_region
      _
    $region13: #{tpu_custom_call.1} parent=1 // pred_fallthru
      _
    // Predicated region
    $region14: #{tpu_custom_call.1} parent=1 // pred_check
      _
    $region15: #{tpu_custom_call.1} parent=1 // pred_check_branch
      %17 = sbr.rel (0) target = $region17
    $region16: #{tpu_custom_call.1} parent=1 // pred_region
      _
    $region17: #{tpu_custom_call.1} parent=1 // pred_fallthru
      _
    %v18 = vld [vmem:[%s0] sm:$0x3]
    %v19 = vmul.f32 %v18, %v18
    %vm20 = vcmask 1041408
    %v21 = vsel %vm20, %v19, 0.0
    %v22 = vrot.slane %v21, 4
    %v23 = vadd.f32 %v21, %v22
    %v24 = vrot.slane %v23, 2
    %v25 = vadd.f32 %v23, %v24
    %v26 = vrot.slane %v25, 1
    %v27 = vadd.f32 %v25, %v26
    %v28 = vld [vmem:[%s1] sm:$0xff]
    %30 = vset.pattern.permute.xlu0 0
    %31 = vperm.xlu0 %30, %v28
    %v32 = vpop.permute.xlu0 %31
    %v34 = vperm.slane %v18, 0
    %v35 = vmul.f32 %v32, %v34
    %36 = vset.pattern.permute.xlu0 1
    %37 = vperm.xlu0 %36, %v28
    %v38 = vpop.permute.xlu0 %37
    %v40 = vperm.slane %v18, 1
    %v41 = vmul.f32 %v38, %v40
    %v42 = vadd.f32 %v35, %v41
    %v43 = vld [vmem:[%s2] sm:$0xff]
    %45 = vset.pattern.permute.xlu0 0
    %46 = vperm.xlu0 %45, %v43
    %v47 = vpop.permute.xlu0 %46
    %v49 = vadd.f32 %v47, %v27
    %v50 = vmul.f32 %v42, 2.0
    %v51 = vsub.f32 %v49, %v50
    %v52 = vmul.f32 %v51, -0.5
    %v53 = vmul.f32 %v52, 1.442695
    %v54 = vpow.pop %v53
    %v55 = vld [vmem:[%s3] sm:$0x3]
    %57 = vset.pattern.permute.xlu0 0
    %58 = vperm.xlu0 %57, %v55
    %v59 = vpop.permute.xlu0 %58
    %v61 = vperm.slane %v54, 0
    %v62 = vmul.f32 %v59, %v61
    %63 = vset.pattern.permute.xlu0 1
    %64 = vperm.xlu0 %63, %v55
    %v65 = vpop.permute.xlu0 %64
    %v67 = vperm.slane %v54, 1
    %v68 = vmul.f32 %v65, %v67
    %v69 = vadd.f32 %v62, %v68
    %70 = vset.pattern.permute.xlu0 2
    %71 = vperm.xlu0 %70, %v55
    %v72 = vpop.permute.xlu0 %71
    %v74 = vperm.slane %v54, 2
    %v75 = vmul.f32 %v72, %v74
    %v76 = vadd.f32 %v69, %v75
    %77 = vset.pattern.permute.xlu0 3
    %78 = vperm.xlu0 %77, %v55
    %v79 = vpop.permute.xlu0 %78
    %v81 = vperm.slane %v54, 3
    %v82 = vmul.f32 %v79, %v81
    %v83 = vadd.f32 %v76, %v82
    %84 = vset.pattern.permute.xlu0 4
    %85 = vperm.xlu0 %84, %v55
    %v86 = vpop.permute.xlu0 %85
    %v88 = vperm.slane %v54, 4
    %v89 = vmul.f32 %v86, %v88
    %v90 = vadd.f32 %v83, %v89
    %91 = vset.pattern.permute.xlu0 5
    %92 = vperm.xlu0 %91, %v55
    %v93 = vpop.permute.xlu0 %92
    %v95 = vperm.slane %v54, 5
    %v96 = vmul.f32 %v93, %v95
    %v97 = vadd.f32 %v90, %v96
    %98 = vset.pattern.permute.xlu0 6
    %99 = vperm.xlu0 %98, %v55
    %v100 = vpop.permute.xlu0 %99
    %v102 = vperm.slane %v54, 6
    %v103 = vmul.f32 %v100, %v102
    %v104 = vadd.f32 %v97, %v103
    %105 = vset.pattern.permute.xlu0 7
    %106 = vperm.xlu0 %105, %v55
    %v107 = vpop.permute.xlu0 %106
    %v109 = vperm.slane %v54, 7
    %v110 = vmul.f32 %v107, %v109
    %v111 = vadd.f32 %v104, %v110
    %112 = vst [vmem:[#allocation2] sm:$0x3] %v111
    // Predicated region
    $region18: #{tpu_custom_call.1} parent=1 // pred_check
      _
    $region19: #{tpu_custom_call.1} parent=1 // pred_check_branch
      %114 = sbr.rel (0) target = $region21
    $region20: #{tpu_custom_call.1} parent=1 // pred_region
      %116 = vsyncadd [#allocation3], 0
      %s118 = sshll.u32 [#allocation2], 4
      %s119 = int_to_ptr.vmem [resolvable:$true] %s118
      %s120 = sshll.u32 %s4, 4
      %s121 = int_to_ptr.hbm [resolvable:$true] %s120
      %123 = dma.vmem_to_hbm [thread:$0]  %s119, 32, %s121, [#allocation3]
    $region21: #{tpu_custom_call.1} parent=1 // pred_fallthru
      _
    // Predicated region
    $region22: #{tpu_custom_call.1} parent=1 // pred_check
      _
    $region23: #{tpu_custom_call.1} parent=1 // pred_check_branch
      %125 = sbr.rel (0) target = $region25
    $region24: #{tpu_custom_call.1} parent=1 // pred_region
      %127 = dma.done [#allocation3], 32
    $region25: #{tpu_custom_call.1} parent=1 // pred_fallthru
      _
    %128 = vsyncpa [#allocation3], 1

</llo_original>
